<compile_context>
chip_gen: v5e
topology: v5e:2x2
jax: 0.10.0
libtpu: 0.0.40
codegen_flags: <defaults>
</compile_context>

<pallas_src>
import functools

import jax
import jax.numpy as jnp
from jax.experimental import pallas as pl
from jax.experimental.pallas import tpu as pltpu


# ----------------------------- Pallas kernel --------------------------------

def critic_head_kernel(x_ref, w1_ref, bw_ref, b2_ref, out_ref, acc_ref, *,
                       true_b, tile_b, need_mask):
    # x_ref   : (tile_b, state_dim)  VMEM, pipelined over the batch grid axis
    # w1_ref  : (state_dim, hdim)    VMEM, constant index_map -> resident
    # bw_ref  : (2, hdim)            VMEM, row 0 = ff1 bias, row 1 = critic weight^T
    # b2_ref  : (1, 1)               SMEM scalar (critic bias)
    # out_ref : (1, 1)               SMEM scalar = mean(sigmoid(critic(tanh(ff1(x)))))
    # acc_ref : (1, 1)               VMEM scratch, running sum of sigmoid(...)
    i = pl.program_id(0)

    @pl.when(i == 0)
    def _init():
        acc_ref[...] = jnp.zeros_like(acc_ref)

    # (tile_b, hdim) = tanh(x @ w1 + b1)   — MXU matmul, f32 accumulation, EUP tanh
    h = jnp.tanh(
        jnp.dot(x_ref[...], w1_ref[...], preferred_element_type=jnp.float32)
        + bw_ref[0:1, :]
    )
    # hdim -> 1 projection: VPU broadcast-multiply + XLU lane reduce (no N=1 MXU matmul)
    s = jnp.sum(h * bw_ref[1:2, :], axis=-1, keepdims=True) + b2_ref[0, 0]
    p = jax.nn.sigmoid(s)                                        # (tile_b, 1) f32
    if need_mask:  # zero contributions from batch-padding rows (static branch)
        row = i * tile_b + jax.lax.broadcasted_iota(jnp.int32, (tile_b, 1), 0)
        p = jnp.where(row < true_b, p, 0.0)
    acc_ref[...] += jnp.sum(p, keepdims=True)                    # (1, 1)

    @pl.when(i == pl.num_programs(0) - 1)
    def _finalize():
        out_ref[0, 0] = jnp.sum(acc_ref[...]) * (1.0 / true_b)   # mean over true batch


def _round_up(x, m):
    return (x + m - 1) // m * m


def critic_head(x_out, w1, bw, b2, *, tile_b=None):
    """Fused critic head: mean(sigmoid(tanh(x_out @ w1 + b1) @ w2 + b2)) -> f32 scalar.

    x_out and w1 must ALREADY be in the desired matmul (compute) dtype; no per-call
    casts are done here.  bf16 operands are fine on every generation including v5e
    (bf16-native MXU); elementwise math stays f32 in-kernel.
    """
    B, D = x_out.shape
    D2, H = w1.shape
    assert D == D2, (x_out.shape, w1.shape)
    assert bw.shape == (2, H) and b2.shape == (1, 1)
    assert x_out.dtype == w1.dtype, "store x_out and w1 in the same compute dtype"

    if tile_b is None:
        # 256-512 row tiles keep VMEM bounded on v7x while saturating the MXU;
        # tiny batches collapse to a single (sublane-aligned) tile.
        tile_b = min(512, _round_up(B, 8))
    padded_b = _round_up(B, tile_b)
    x_in = x_out if padded_b == B else jnp.pad(x_out, ((0, padded_b - B), (0, 0)))
    grid = (padded_b // tile_b,)

    itemsize = jnp.dtype(x_out.dtype).itemsize
    cost = pl.CostEstimate(
        flops=2 * padded_b * D * H + 3 * padded_b * H,
        transcendentals=padded_b * H + padded_b,
        bytes_accessed=(padded_b * D + D * H) * itemsize + (2 * H + 2 + 1) * 4,
    )

    kernel = functools.partial(
        critic_head_kernel, true_b=B, tile_b=tile_b, need_mask=(padded_b != B))

    out = pl.pallas_call(
        kernel,
        out_shape=jax.ShapeDtypeStruct((1, 1), jnp.float32),
        grid=grid,
        in_specs=[
            pl.BlockSpec((tile_b, D), lambda i: (i, 0)),           # x tile (pipelined)
            pl.BlockSpec((D, H), lambda i: (0, 0)),                # w1, VMEM-resident
            pl.BlockSpec((2, H), lambda i: (0, 0)),                # packed [b1; w2^T]
            pl.BlockSpec(memory_space=pltpu.MemorySpace.SMEM),     # b2 scalar
        ],
        out_specs=pl.BlockSpec(memory_space=pltpu.MemorySpace.SMEM),
        scratch_shapes=[pltpu.VMEM((1, 1), jnp.float32)],
        compiler_params=pltpu.CompilerParams(
            dimension_semantics=("arbitrary",),    # reduction axis; keep on one TC
            vmem_limit_bytes=32 * 1024 * 1024,
        ),
        cost_estimate=cost,
    )(x_in, w1, bw, b2)
    return out[0, 0]


# ------------------------- parameter construction ---------------------------

def xavier_uniform(key, fan_in, fan_out):
    # matches nn.init.xavier_uniform_ on a (out, in) torch weight, returned transposed
    bound = (6.0 / (fan_in + fan_out)) ** 0.5
    return jax.random.uniform(key, (fan_in, fan_out), jnp.float32, -bound, bound)


def linear_bias(key, fan_in, fan_out):
    # nn.Linear default bias init: U(-1/sqrt(fan_in), 1/sqrt(fan_in))
    bound = 1.0 / (fan_in ** 0.5)
    return jax.random.uniform(key, (fan_out,), jnp.float32, -bound, bound)


def make_critic_params(key, state_dim, hdim):
    k1, k2, k3, k4 = jax.random.split(key, 4)
    return {
        "ff1_w": xavier_uniform(k1, state_dim, hdim),   # (state_dim, hdim)
        "ff1_b": linear_bias(k2, state_dim, hdim),      # (hdim,)
        "crit_w": xavier_uniform(k3, hdim, 1),          # (hdim, 1)
        "crit_b": linear_bias(k4, hdim, 1),             # (1,)
    }


def prep_critic_head_params(params, *, compute_dtype=jnp.float32):
    """One-time packing (outside the hot loop): w1 stored in compute_dtype; b1 and w2^T
    packed into one (2,H) f32 operand; b2 as a (1,1) SMEM scalar."""
    H = params["ff1_w"].shape[1]
    return {
        "w1": params["ff1_w"].astype(compute_dtype),                      # (D, H)
        "bw": jnp.concatenate(
            [params["ff1_b"].reshape(1, H).astype(jnp.float32),
             params["crit_w"].reshape(1, H).astype(jnp.float32)], axis=0),  # (2, H)
        "b2": params["crit_b"].reshape(1, 1).astype(jnp.float32),         # (1, 1)
    }


# -------------------- synthetic stand-in for the base network ---------------
# TODO(synk): pretrained_model is an external BERT checkpoint (BaseNetwork); replaced
# here by a deterministic synthetic embedding encoder producing (B, seq, state_dim);
# the CriticNetwork head only consumes the CLS vector [:, 0, :].

def synthetic_base_network(base_params, tokens, att_mask, segment_ids):
    tok = base_params["tok_emb"][tokens]        # (B, S, state_dim)
    seg = base_params["seg_emb"][segment_ids]   # (B, S, state_dim)
    hidden = (tok + seg) * att_mask[..., None].astype(jnp.float32)
    return hidden                               # "[0]" of the pretrained output


def critic_network_forward(base_params, head, x, att_mask, segment_ids):
    hidden = synthetic_base_network(base_params, x, att_mask, segment_ids)
    x_out = jax.lax.stop_gradient(hidden[:, 0, :])   # CLS vector (B, state_dim); .detach()
    # cast only if the head compute dtype differs (no-op in the f32 demo)
    x_in = x_out if x_out.dtype == head["w1"].dtype else x_out.astype(head["w1"].dtype)
    out = critic_head(x_in, head["w1"], head["bw"], head["b2"])
    return x_out, out


# ---------------------------------- main -------------------------------------

if __name__ == "__main__":
    # small, module-consistent shapes
    B, S = 2, 8           # batch, sequence length
    VOCAB = 50
    STATE_DIM = 32        # args.state_dim (pretrained hidden size)
    HDIM = 32             # args.hdim

    key = jax.random.PRNGKey(0)
    k_emb, k_seg, k_crit, k_tok = jax.random.split(key, 4)

    params = make_critic_params(k_crit, STATE_DIM, HDIM)
    base_params = {
        "tok_emb": jax.random.normal(k_emb, (VOCAB, STATE_DIM), jnp.float32) * 0.02,
        "seg_emb": jax.random.normal(k_seg, (2, STATE_DIM), jnp.float32) * 0.02,
    }
    # f32 compute at toy sizes; switch compute_dtype=jnp.bfloat16 for BERT-sized D/H
    # (valid on v5e/v6e/v7x alike) and loosen the tolerance below accordingly.
    head = prep_critic_head_params(params, compute_dtype=jnp.float32)

    x = jax.random.randint(k_tok, (B, S), 0, VOCAB, dtype=jnp.int32)
    att_mask = jnp.ones((B, S), dtype=jnp.int32)
    segment_ids = jnp.zeros((B, S), dtype=jnp.int32)

    x_out, out = critic_network_forward(base_params, head, x, att_mask, segment_ids)
    jax.block_until_ready((x_out, out))

    # sanity check against a plain-JAX reference of the critic head
    ref = jnp.mean(
        jax.nn.sigmoid(
            jnp.tanh(x_out @ params["ff1_w"] + params["ff1_b"]) @ params["crit_w"]
            + params["crit_b"]
        )
    )
    assert x_out.shape == (B, STATE_DIM)
    assert out.shape == ()
    assert jnp.allclose(out, ref, atol=1e-5), (out, ref)

    print("KERNEL_OK")
</pallas_src>

<mosaic_0001>
module attributes {stable_mosaic.version = 11 : i64} {
  func.func @critic_head_kernel(%arg0: i32, %arg1: memref<8x32xf32, #tpu.memory_space<vmem>>, %arg2: memref<32x32xf32, #tpu.memory_space<vmem>>, %arg3: memref<2x32xf32, #tpu.memory_space<vmem>>, %arg4: memref<1x1xf32, #tpu.memory_space<smem>>, %arg5: memref<1x1xf32, #tpu.memory_space<smem>>, %arg6: memref<1x1xf32, #tpu.memory_space<vmem>>) attributes {dimension_semantics = [#tpu.dimension_semantics<arbitrary>], iteration_bounds = array<i64: 1>, scalar_prefetch = 0 : i64, scratch_operands = 1 : i64, tpu.core_type = #tpu.core_type<tc>, window_params = [{transform_indices = @transform_0, window_bounds = array<i64: 8, 32>}, {pipeline_mode = #tpu.pipeline_mode<synchronous>, transform_indices = @transform_1, window_bounds = array<i64: 32, 32>}, {pipeline_mode = #tpu.pipeline_mode<synchronous>, transform_indices = @transform_2, window_bounds = array<i64: 2, 32>}, {transform_indices = @transform_3, window_bounds = array<i64: 1, 1>}, {transform_indices = @transform_4, window_bounds = array<i64: 1, 1>}]} {
    %c0_i32 = arith.constant 0 : i32
    %0 = arith.cmpi eq, %arg0, %c0_i32 : i32
    %1 = arith.extui %0 : i1 to i32
    %c0_i32_0 = arith.constant 0 : i32
    %2 = arith.cmpi ne, %1, %c0_i32_0 : i32
    scf.if %2 {
      %cst_19 = arith.constant 0.000000e+00 : f32
      %42 = vector.broadcast %cst_19 : f32 to vector<1x1xf32>
      %c0_20 = arith.constant 0 : index
      %c0_21 = arith.constant 0 : index
      %43 = vector.load %arg6[%c0_20, %c0_21] : memref<1x1xf32, #tpu.memory_space<vmem>>, vector<1x1xf32>
      tpu.vector_store %arg6[%c0_20, %c0_21], %42 {strides = array<i32>} : memref<1x1xf32, #tpu.memory_space<vmem>>, vector<1x1xf32>,
    } else {
    }
    %c0 = arith.constant 0 : index
    %c0_1 = arith.constant 0 : index
    %3 = vector.load %arg1[%c0, %c0_1] : memref<8x32xf32, #tpu.memory_space<vmem>>, vector<8x32xf32>
    %c0_2 = arith.constant 0 : index
    %c0_3 = arith.constant 0 : index
    %4 = vector.load %arg2[%c0_2, %c0_3] : memref<32x32xf32, #tpu.memory_space<vmem>>, vector<32x32xf32>
    %cst = arith.constant dense<0.000000e+00> : vector<8x32xf32>
    %5 = tpu.matmul %3, %4, %cst {dimension_numbers = #tpu.dot_dimension_numbers<[1], [0], [0], [1], [0, 0, 1, 1], [], []>} : vector<8x32xf32>, vector<32x32xf32>, vector<8x32xf32> -> vector<8x32xf32>
    %c0_4 = arith.constant 0 : index
    %c0_5 = arith.constant 0 : index
    %6 = vector.load %arg3[%c0_4, %c0_5] : memref<2x32xf32, #tpu.memory_space<vmem>>, vector<1x32xf32>
    %7 = vector.broadcast %6 : vector<1x32xf32> to vector<8x32xf32>
    %8 = arith.addf %5, %7 : vector<8x32xf32>
    %9 = math.tanh %8 : vector<8x32xf32>
    %c1 = arith.constant 1 : index
    %c0_6 = arith.constant 0 : index
    %10 = vector.load %arg3[%c1, %c0_6] : memref<2x32xf32, #tpu.memory_space<vmem>>, vector<1x32xf32>
    %11 = vector.broadcast %10 : vector<1x32xf32> to vector<8x32xf32>
    %12 = arith.mulf %9, %11 : vector<8x32xf32>
    %cst_7 = arith.constant dense<0.000000e+00> : vector<8xf32>
    %13 = vector.multi_reduction <add>, %12, %cst_7 [1] : vector<8x32xf32> to vector<8xf32>
    %14 = vector.shape_cast %13 : vector<8xf32> to vector<8x1xf32>
    %c0_8 = arith.constant 0 : index
    %c0_9 = arith.constant 0 : index
    %15 = memref.load %arg4[%c0_8, %c0_9] : memref<1x1xf32, #tpu.memory_space<smem>>
    %16 = vector.broadcast %15 : f32 to vector<8x1xf32>
    %17 = arith.addf %14, %16 : vector<8x1xf32>
    %18 = arith.negf %17 : vector<8x1xf32>
    %19 = math.exp %18 : vector<8x1xf32>
    %cst_10 = arith.constant 1.000000e+00 : f32
    %20 = vector.broadcast %cst_10 : f32 to vector<8x1xf32>
    %21 = arith.addf %20, %19 : vector<8x1xf32>
    %22 = arith.divf %20, %21 : vector<8x1xf32>
    %c8_i32 = arith.constant 8 : i32
    %23 = arith.muli %arg0, %c8_i32 : i32
    %24 = tpu.iota {dimensions = array<i32: 0>} : vector<8x1xi32>
    %25 = vector.broadcast %23 : i32 to vector<8x1xi32>
    %26 = arith.addi %25, %24 : vector<8x1xi32>
    %c2_i32 = arith.constant 2 : i32
    %27 = vector.broadcast %c2_i32 : i32 to vector<8x1xi32>
    %28 = arith.cmpi slt, %26, %27 : vector<8x1xi32>
    %cst_11 = arith.constant 0.000000e+00 : f32
    %29 = vector.broadcast %cst_11 : f32 to vector<8x1xf32>
    %30 = arith.select %28, %22, %29 : vector<8x1xi1>, vector<8x1xf32>
    %c0_12 = arith.constant 0 : index
    %c0_13 = arith.constant 0 : index
    %31 = vector.load %arg6[%c0_12, %c0_13] : memref<1x1xf32, #tpu.memory_space<vmem>>, vector<1x1xf32>
    %32 = vector.shape_cast %30 : vector<8x1xf32> to vector<1x8x1xf32>
    %cst_14 = arith.constant dense<0.000000e+00> : vector<1xf32>
    %33 = vector.multi_reduction <add>, %32, %cst_14 [1, 2] : vector<1x8x1xf32> to vector<1xf32>
    %34 = vector.shape_cast %33 : vector<1xf32> to vector<1x1x1xf32>
    %35 = vector.extract %34[0, 0, 0] : f32 from vector<1x1x1xf32>
    %36 = vector.broadcast %35 : f32 to vector<1x1xf32>
    %37 = arith.addf %31, %36 : vector<1x1xf32>
    %c0_15 = arith.constant 0 : index
    %c0_16 = arith.constant 0 : index
    %38 = vector.load %arg6[%c0_15, %c0_16] : memref<1x1xf32, #tpu.memory_space<vmem>>, vector<1x1xf32>
    tpu.vector_store %arg6[%c0_15, %c0_16], %37 {strides = array<i32>} : memref<1x1xf32, #tpu.memory_space<vmem>>, vector<1x1xf32>,
    %c0_i32_17 = arith.constant 0 : i32
    %39 = arith.cmpi eq, %arg0, %c0_i32_17 : i32
    %40 = arith.extui %39 : i1 to i32
    %c0_i32_18 = arith.constant 0 : i32
    %41 = arith.cmpi ne, %40, %c0_i32_18 : i32
    scf.if %41 {
      %c0_19 = arith.constant 0 : index
      %c0_20 = arith.constant 0 : index
      %42 = vector.load %arg6[%c0_19, %c0_20] : memref<1x1xf32, #tpu.memory_space<vmem>>, vector<1x1xf32>
      %43 = vector.shape_cast %42 : vector<1x1xf32> to vector<1x1x1xf32>
      %cst_21 = arith.constant dense<0.000000e+00> : vector<1xf32>
      %44 = vector.multi_reduction <add>, %43, %cst_21 [1, 2] : vector<1x1x1xf32> to vector<1xf32>
      %45 = vector.shape_cast %44 : vector<1xf32> to vector<1x1x1xf32>
      %46 = vector.extract %45[0, 0, 0] : f32 from vector<1x1x1xf32>
      %cst_22 = arith.constant 5.000000e-01 : f32
      %47 = arith.mulf %46, %cst_22 : f32
      %c0_23 = arith.constant 0 : index
      %c0_24 = arith.constant 0 : index
      %48 = memref.load %arg5[%c0_23, %c0_24] : memref<1x1xf32, #tpu.memory_space<smem>>
      memref.store %47, %arg5[%c0_23, %c0_24] : memref<1x1xf32, #tpu.memory_space<smem>>
    } else {
    }
    return
  }
  func.func @transform_0(%arg0: i32) -> (i32, i32) {
    %c0_i32 = arith.constant 0 : i32
    %c0_i32_0 = arith.constant 0 : i32
    return %arg0, %c0_i32 : i32, i32
  }
  func.func @transform_1(%arg0: i32) -> (i32, i32) {
    %c0_i32 = arith.constant 0 : i32
    %c0_i32_0 = arith.constant 0 : i32
    %c0_i32_1 = arith.constant 0 : i32
    return %c0_i32, %c0_i32_0 : i32, i32
  }
  func.func @transform_2(%arg0: i32) -> (i32, i32) {
    %c0_i32 = arith.constant 0 : i32
    %c0_i32_0 = arith.constant 0 : i32
    %c0_i32_1 = arith.constant 0 : i32
    return %c0_i32, %c0_i32_0 : i32, i32
  }
  func.func @transform_3(%arg0: i32) -> (i32, i32) {
    %c0_i32 = arith.constant 0 : i32
    %c0_i32_0 = arith.constant 0 : i32
    %c0_i32_1 = arith.constant 0 : i32
    return %c0_i32, %c0_i32_0 : i32, i32
  }
  func.func @transform_4(%arg0: i32) -> (i32, i32) {
    %c0_i32 = arith.constant 0 : i32
    %c0_i32_0 = arith.constant 0 : i32
    %c0_i32_1 = arith.constant 0 : i32
    return %c0_i32, %c0_i32_0 : i32, i32
  }
}

</mosaic_0001>

<llo_original>
// kernel: tpu_custom_call.1
$region0: #{tpu_custom_call.1}
  #allocation0 [shape = 'u32[]', space=smem, size = 0x4, offset = 0x4, fixed_abs, tag = 'smem constant byte address 0x4 - core index']
  #allocation1 [shape = 'u32[72,128]{1,0:T(1,128)}', space=vmem, size = 0x9000, scoped, tag = 'internal scratch']
  #allocation2 [shape = 'f32[1,1]{1,0:T(1,128)}', space=vmem, size = 0x200, scoped, tag = 'scratch operand']
  #allocation3 [shape = 'f32[1,1]{1,0:T(1,128)S(6)}', space=smem, size = 0x200, scoped, tag = 'scoped memory for tpu_custom_call.1']
  %s0 = inlined_call_operand.hbm [shape: f32[8,32], index: 0, kind: input, shape index: {}]
  %s1 = inlined_call_operand.hbm [shape: f32[32,32], index: 1, kind: input, shape index: {}]
  %s2 = inlined_call_operand.vmem [shape: f32[2,32], index: 2, kind: input, shape index: {}]
  %s3 = inlined_call_operand.<no memory space> [shape: f32[1,1], index: 3, kind: input, shape index: {}]
  %s4 = inlined_call_operand.hbm [shape: f32[1,1], index: 4, kind: output, shape index: {}]
  %s5 = sld [smem:[#allocation0]]
  $region42: #{tpu_custom_call.1} parent=0
    _
  %s7 = ssub.s32 1, %s5
  %s8 = scalar_select 0, %s7, %s5
  %9 = sst [smem:[#allocation3]] %s3
  $region1: #{tpu_custom_call.1} parent=0
    #allocation4 [shape = 'u8[4096]{0}', space=vmem, size = 0x1000, scoped, tag = 'input window, operand 0, single buffered']
    #allocation5 [shape = 's32[1]{0}', space=sflag, size = 0x4, scoped, tag = 'scoped memory for tpu_custom_call.1']
    #allocation6 [shape = 's32[1]{0}', space=sflag, size = 0x4, scoped, tag = 'scoped memory for tpu_custom_call.1']
    #allocation7 [shape = 'u8[16384]{0}', space=vmem, size = 0x4000, scoped, tag = 'input window, operand 1, single buffered']
    #allocation8 [shape = 's32[1]{0}', space=sflag, size = 0x4, scoped, tag = 'scoped memory for tpu_custom_call.1']
    #allocation9 [shape = 'u8[512]{0}', space=smem, size = 0x200, scoped, tag = 'output window, operand 0, single buffered']
    %10 = vsyncpa [#allocation5], 0
    %11 = vsyncpa [#allocation8], 0
    %12 = vsyncpa [#allocation6], 0
    // Predicated region
    $region2: #{tpu_custom_call.1} parent=1 // pred_check
      _
    $region3: #{tpu_custom_call.1} parent=1 // pred_check_branch
      %14 = sbr.rel (0) target = $region5
    $region4: #{tpu_custom_call.1} parent=1 // pred_region
      %16 = vsyncadd [#allocation5], 0
      %s18 = sshll.u32 %s0, 4
      %s19 = int_to_ptr.hbm [resolvable:$true] %s18
      %s20 = sshll.u32 [#allocation4], 4
      %s21 = int_to_ptr.vmem [resolvable:$true] %s20
      %23 = dma.hbm_to_vmem [thread:$0]  %s19, 128, %s21, [#allocation5]
    $region5: #{tpu_custom_call.1} parent=1 // pred_fallthru
      _
    // Predicated region
    $region6: #{tpu_custom_call.1} parent=1 // pred_check
      _
    $region7: #{tpu_custom_call.1} parent=1 // pred_check_branch
      %25 = sbr.rel (0) target = $region9
    $region8: #{tpu_custom_call.1} parent=1 // pred_region
      %27 = vsyncadd [#allocation8], 0
      %s28 = sshll.u32 %s1, 4
      %s29 = int_to_ptr.hbm [resolvable:$true] %s28
      %s30 = sshll.u32 [#allocation7], 4
      %s31 = int_to_ptr.vmem [resolvable:$true] %s30
      %36 = dma.hbm_to_vmem [thread:$0]  %s29, 512, %s31, [#allocation8], 128, 128, 8
    $region9: #{tpu_custom_call.1} parent=1 // pred_fallthru
      _
    // Predicated region
    $region10: #{tpu_custom_call.1} parent=1 // pred_check
      _
    $region11: #{tpu_custom_call.1} parent=1 // pred_check_branch
      %38 = sbr.rel (0) target = $region13
    $region12: #{tpu_custom_call.1} parent=1 // pred_region
      _
    $region13: #{tpu_custom_call.1} parent=1 // pred_fallthru
      _
    // Predicated region
    $region14: #{tpu_custom_call.1} parent=1 // pred_check
      _
    $region15: #{tpu_custom_call.1} parent=1 // pred_check_branch
      %40 = sbr.rel (0) target = $region17
    $region16: #{tpu_custom_call.1} parent=1 // pred_region
      _
    $region17: #{tpu_custom_call.1} parent=1 // pred_fallthru
      _
    // Predicated region
    $region18: #{tpu_custom_call.1} parent=1 // pred_check
      _
    $region19: #{tpu_custom_call.1} parent=1 // pred_check_branch
      %42 = sbr.rel (0) target = $region21
    $region20: #{tpu_custom_call.1} parent=1 // pred_region
      %44 = dma.done [#allocation5], 128
    $region21: #{tpu_custom_call.1} parent=1 // pred_fallthru
      _
    // Predicated region
    $region22: #{tpu_custom_call.1} parent=1 // pred_check
      _
    $region23: #{tpu_custom_call.1} parent=1 // pred_check_branch
      %46 = sbr.rel (0) target = $region25
    $region24: #{tpu_custom_call.1} parent=1 // pred_region
      %48 = dma.done [#allocation8], 512
    $region25: #{tpu_custom_call.1} parent=1 // pred_fallthru
      _
    %p49 = scmp.eq.s32.totalorder 0, 0
    // Predicated region
    $region26: #{tpu_custom_call.1} parent=1 // pred_check
      %p50 = pneg %p49
    $region27: #{tpu_custom_call.1} parent=1 // pred_check_branch
      %52 = sbr.rel (%p50) target = $region29
    $region28: #{tpu_custom_call.1} parent=1 // pred_region
      %vm53 = vcmask 0
      %54 = vst.msk [vmem:[#allocation2] sm:$0x1] %vm53, 0.0
    $region29: #{tpu_custom_call.1} parent=1 // pred_fallthru
      _
    %v55 = vld [vmem:[#allocation4] sm:$0xff]
    %v56 = vld [vmem:[#allocation7] sm:$0xff]
    %v57 = vld [vmem:[#allocation7 + $0x8] sm:$0xff]
    %v58 = vld [vmem:[#allocation7 + $0x10] sm:$0xff]
    %v59 = vld [vmem:[#allocation7 + $0x18] sm:$0xff]
    %v60 = vld [vmem:[%s2] sm:$0x1]
    %v61 = vperm.slane %v60, 0
    %vm62 = vcmask 261120
    %v64 = vsel %vm62, %v55, 0
    %66 = vmatpush.msra.mxu0 0.0
    %67 = vmatpush.msra.mxu0 0.0
    %68 = vmatpush.msra.mxu0 0.0
    %69 = vmatpush.msra.mxu0 0.0
    %70 = vmatpush.msra.mxu0 0.0
    %71 = vmatpush.msra.mxu0 0.0
    %72 = vmatpush.msra.mxu0 0.0
    %73 = vmatpush.msra.mxu0 0.0
    %74 = vmatpush.msra.mxu0 0.0
    %75 = vmatpush.msra.mxu0 0.0
    %76 = vmatpush.msra.mxu0 0.0
    %77 = vmatpush.msra.mxu0 0.0
    %78 = vmatpush.msra.mxu0 %v59
    %79 = vmatpush.msra.mxu0 %v58
    %80 = vmatpush.msra.mxu0 %v57
    %81 = vmatpush.msra.mxu0 %v56
    %82 = vmatmul.f32.gmra.mxu0 %v64
    %v83 = vpop.f32.mrf.mxu0
    %v84 = vadd.f32 %v61, %v83
    %85 = vdwg.mxu0
    %v86 = vtanh.pop %v84
    %v87 = vld [vmem:[%s2 + $0x1] sm:$0x1]
    %v88 = vperm.slane %v87, 0
    %v89 = vmul.f32 %v86, %v88
    %v90 = vsel %vm62, %v89, 0.0
    %91 = vadd.xlane.f32.xlu0 %v90
    %v92 = vpop.xlane.xlu0 %91
    %s93 = sld [smem:[#allocation3]]
    %v94 = vstv %s93
    %v95 = vadd.f32 %v92, %v94
    %v96 = vxor.u32 %v95, 2147483648
    %v97 = vmul.f32 %v96, 1.442695
    %v98 = vpow.pop %v97
    %v99 = vadd.f32 %v98, 1.0
    %v100 = vrcp.pop %v99
    %v101 = vmul.f32 %v99, %v100
    %v102 = vsub.f32 1.0, %v101
    %v103 = vmul.f32 %v100, %v102
    %v104 = vadd.f32 %v100, %v103
    %vm105 = vweird.f32 %v99
    %vm106 = vweird.f32 %v100
    %vm107 = vmor %vm105, %vm106
    %v108 = vsel %vm107, %v100, %v104
    %v109 = vand.u32 2147483647, %v99
    %vm110 = vcmp.eq.f32.partialorder %v109, 8.507059e+37
    %v111 = vand.u32 %v99, 2147483648
    %v112 = vor.u32 1.1754944e-38, %v111
    %v113 = vsel %vm110, %v112, %v108
    %v114 = vmul.f32 1.0, %v113
    %s115 = smul.u32 0, 8
    %v116 = vlaneseq
    %v117 = vshrl.u32 %v116, 7
    %v118 = vstv %s115
    %v119 = vadd.s32 %v118, %v117
    %vm120 = vcmp.lt.s32.totalorder %v119, 2
    %v121 = vsel %vm120, %v114, 0.0
    %v122 = vld [vmem:[#allocation2] sm:$0x1]
    %vm123 = vcmask 7168
    %v124 = vsel %vm123, %v121, 0.0
    %125 = vadd.xlane.f32.xlu0 %v124
    %v126 = vpop.xlane.xlu0 %125
    %v127 = vrot.slane %v126, 4
    %v128 = vadd.f32 %v126, %v127
    %v129 = vrot.slane %v128, 2
    %v130 = vadd.f32 %v128, %v129
    %v131 = vrot.slane %v130, 1
    %v132 = vadd.f32 %v130, %v131
    %s133 = vtos %v132
    %v134 = vstv %s133
    %v135 = vadd.f32 %v122, %v134
    %vm136 = vcmask 0
    %137 = vst.msk [vmem:[#allocation2] sm:$0x1] %vm136, %v135
    // Predicated region
    $region30: #{tpu_custom_call.1} parent=1 // pred_check
      %p138 = pneg %p49
    $region31: #{tpu_custom_call.1} parent=1 // pred_check_branch
      %140 = sbr.rel (%p138) target = $region33
    $region32: #{tpu_custom_call.1} parent=1 // pred_region
      %v141 = vld [vmem:[#allocation2] sm:$0x1]
      %v142 = vadd.f32 %v141, 0.0
      %s143 = vtos %v142
      %s144 = smul.f32 %s143, 0.5
      %s145 = scalar_lea.smem [#allocation9], 0
      %146 = sst [smem:[%s145]] %s144
    $region33: #{tpu_custom_call.1} parent=1 // pred_fallthru
      _
    // Predicated region
    $region34: #{tpu_custom_call.1} parent=1 // pred_check
      _
    $region35: #{tpu_custom_call.1} parent=1 // pred_check_branch
      %148 = sbr.rel (0) target = $region37
    $region36: #{tpu_custom_call.1} parent=1 // pred_region
      %150 = vsyncadd [#allocation6], 0
      %s152 = sshll.u32 %s4, 4
      %s153 = int_to_ptr.hbm [resolvable:$true] %s152
      %155 = dma.smem_to_hbm [#allocation9], 16, %s153, [#allocation6]
    $region37: #{tpu_custom_call.1} parent=1 // pred_fallthru
      _
    // Predicated region
    $region38: #{tpu_custom_call.1} parent=1 // pred_check
      _
    $region39: #{tpu_custom_call.1} parent=1 // pred_check_branch
      %157 = sbr.rel (0) target = $region41
    $region40: #{tpu_custom_call.1} parent=1 // pred_region
      %159 = dma.done [#allocation6], 16
    $region41: #{tpu_custom_call.1} parent=1 // pred_fallthru
      _
    %160 = sfence
    %161 = vsyncpa [#allocation5], 1
    %162 = vsyncpa [#allocation8], 1
    %163 = vsyncpa [#allocation6], 1

</llo_original>
